<compile_context>
chip_gen: v5e
topology: v5e:2x2
jax: 0.10.0
libtpu: 0.0.40
codegen_flags: <defaults>
</compile_context>

<pallas_src>
import jax
import jax.numpy as jnp
from jax.experimental import pallas as pl
from jax.experimental.pallas import tpu as pltpu

NEG_SLOPE = 0.01  # torch.nn.LeakyReLU default negative_slope


def convnsp_head_kernel(x_ref, cw_ref, cb_ref, lw_ref, lb_ref, out_ref):
    """Fused NSP head for one batch tile.

    x_ref   : [Lh*TB, H]   bf16  even-tap CLS rows, tap-major (row = t*TB + b_local)
    cw_ref  : [H, H]       bf16  conv weight, transposed to [H_in, H_out]
    cb_ref  : [1, H]       f32   conv bias
    lw_ref  : [Lh, H, 128] bf16  linear weight per tap, out cols padded 2 -> 128
    lb_ref  : [1, 128]     f32   linear bias, padded 2 -> 128
    out_ref : [TB, 128]    f32   padded logits (lane-dense output block)
    """
    TB = out_ref.shape[0]
    Lh = lw_ref.shape[0]

    # Stage 1: Conv1d(k=1, s=2) for ALL taps & batch rows as a single dense
    # MXU matmul (bf16 inputs, f32 accumulation), then bias + LeakyReLU in f32.
    y = jnp.dot(x_ref[...], cw_ref[...], preferred_element_type=jnp.float32)
    y = y + cb_ref[...]
    a = jnp.where(y >= 0.0, y, NEG_SLOPE * y).astype(jnp.bfloat16)  # [Lh*TB, H]

    # Stage 2: Linear(H*Lh, 2) padded to 128 lanes, accumulated per tap as
    # [TB, H] @ [H, 128] with f32 accumulation. Lh and TB are static Python
    # ints, so every slice below is static and sublane-aligned (TB % 8 == 0).
    acc = jnp.broadcast_to(lb_ref[...], (TB, 128))
    for t in range(Lh):
        a_t = a[t * TB:(t + 1) * TB, :]                     # [TB, H] bf16
        acc = acc + jnp.dot(a_t, lw_ref[t], preferred_element_type=jnp.float32)

    out_ref[...] = acc


def convnsp_head(pooled, conv_w, conv_b, lin_w, lin_b, *, tb=128):
    """pooled: [B, L, H] f32 (per-layer CLS embeddings); conv_w: [H, H, 1];
    conv_b: [H]; lin_w: [2, H*(L//2)] (PyTorch layout); lin_b: [2].
    Returns logits [B, 2].

    tb is the batch tile: rounded to a multiple of 8 and clamped to the batch
    size so tiny batches are not over-padded; 128 is a good production default.
    """
    B, L, H = pooled.shape
    Lh = L // 2
    tb = max(8, ((min(tb, B) + 7) // 8) * 8)
    nb = pl.cdiv(B, tb)
    b_pad = nb * tb

    # --- wrapper-side re-layout (plain XLA, hoisted out of the kernel) ---
    xe = pooled[:, 0:2 * Lh:2, :]                            # even taps [B, Lh, H]
    if b_pad != B:
        xe = jnp.pad(xe, ((0, b_pad - B), (0, 0), (0, 0)))
    # Rows within a batch block are tap-major: row = blk*(Lh*tb) + t*tb + b_local.
    x2 = (xe.reshape(nb, tb, Lh, H)
            .transpose(0, 2, 1, 3)
            .reshape(nb * Lh * tb, H)
            .astype(jnp.bfloat16))

    cw_t = jnp.transpose(conv_w[:, :, 0]).astype(jnp.bfloat16)        # [H_in, H_out]
    cb = conv_b.reshape(1, H).astype(jnp.float32)

    # PyTorch flattens the [B, H, Lh] conv output channel-major (idx = h*Lh + t);
    # permute so lw[t, h, c] == lin_w[c, h*Lh + t], then pad the 2 logits to 128
    # lanes so the kernel's output block is lane-dense.
    lw_k = jnp.transpose(lin_w.reshape(2, H, Lh), (2, 1, 0))           # [Lh, H, 2]
    lw_pad = jnp.pad(lw_k, ((0, 0), (0, 0), (0, 126))).astype(jnp.bfloat16)
    lb_pad = jnp.pad(lin_b.reshape(1, 2), ((0, 0), (0, 126))).astype(jnp.float32)

    grid_spec = pltpu.PrefetchScalarGridSpec(
        num_scalar_prefetch=0,
        grid=(nb,),
        in_specs=[
            pl.BlockSpec((Lh * tb, H), lambda i: (i, 0)),     # batch tile of CLS rows
            pl.BlockSpec((H, H), lambda i: (0, 0)),           # conv weight (resident)
            pl.BlockSpec((1, H), lambda i: (0, 0)),           # conv bias
            pl.BlockSpec((Lh, H, 128), lambda i: (0, 0, 0)),  # linear weight (resident)
            pl.BlockSpec((1, 128), lambda i: (0, 0)),         # linear bias
        ],
        out_specs=pl.BlockSpec((tb, 128), lambda i: (i, 0)),
    )

    out = pl.pallas_call(
        convnsp_head_kernel,
        out_shape=jax.ShapeDtypeStruct((b_pad, 128), jnp.float32),
        grid_spec=grid_spec,
        compiler_params=pltpu.CompilerParams(
            dimension_semantics=("parallel",),       # per-batch-tile independent
            vmem_limit_bytes=32 * 1024 * 1024,       # safe on v5e/v6e/v7x
        ),
    )(x2, cw_t, cb, lw_pad, lb_pad)

    return out[:B, :2]


if __name__ == "__main__":
    # Small, forward-consistent shapes: hidden_size=32, num_hidden_layers=8, batch=2, seq=8.
    B, S, H, NUM_LAYERS = 2, 8, 32, 8
    L = NUM_LAYERS
    Lh = L // 2
    F = H * Lh

    key = jax.random.PRNGKey(0)
    k_hs, k_cw, k_cb, k_lw, k_lb = jax.random.split(key, 5)

    # TODO(synk): the transformer backbone `self.model` is an external module; its
    # `output_hidden_states` tuple is stood in by a deterministic random tensor here.
    hidden_states = jax.random.normal(k_hs, (L + 1, B, S, H), jnp.float32)

    # Glue equivalent of: torch.cat([hs[:, 0].unsqueeze(1) for hs in hidden_states[1:]], dim=1)
    pooled = jnp.transpose(hidden_states[1:, :, 0, :], (1, 0, 2))        # [B, L, H]

    # Deterministic synthetic parameters (shapes from ConvNSP.__init__).
    conv_w = jax.random.normal(k_cw, (H, H, 1), jnp.float32) / jnp.sqrt(H)   # Conv1d(H, H, 1, s=2)
    conv_b = jax.random.normal(k_cb, (H,), jnp.float32) * 0.02
    lin_w = jax.random.normal(k_lw, (2, F), jnp.float32) / jnp.sqrt(F)        # Linear(H*L//2, 2)
    lin_b = jax.random.normal(k_lb, (2,), jnp.float32) * 0.02

    out = convnsp_head(pooled, conv_w, conv_b, lin_w, lin_b)
    out = jax.block_until_ready(out)

    # Plain-JAX f32 reference mirroring the PyTorch (NCL) forward exactly.
    p = jnp.transpose(pooled, (0, 2, 1))                                  # [B, H, L]
    conv = jnp.einsum("oc,bcl->bol", conv_w[:, :, 0], p[:, :, ::2]) + conv_b[None, :, None]
    flat = conv.reshape(B, -1)                                            # channel-major flatten
    act = jnp.where(flat >= 0, flat, NEG_SLOPE * flat)
    ref = act @ lin_w.T + lin_b

    assert out.shape == (B, 2)
    # bf16 MXU inputs with f32 accumulation -> slightly looser tolerance than pure f32.
    assert jnp.allclose(out, ref, atol=2e-2, rtol=2e-2), (out, ref)
    print("KERNEL_OK")
</pallas_src>

<mosaic_0001>
module attributes {stable_mosaic.version = 11 : i64} {
  func.func @convnsp_head_kernel(%arg0: i32, %arg1: memref<32x32xbf16, #tpu.memory_space<vmem>>, %arg2: memref<32x32xbf16, #tpu.memory_space<vmem>>, %arg3: memref<1x32xf32, #tpu.memory_space<vmem>>, %arg4: memref<4x32x128xbf16, #tpu.memory_space<vmem>>, %arg5: memref<1x128xf32, #tpu.memory_space<vmem>>, %arg6: memref<8x128xf32, #tpu.memory_space<vmem>>) attributes {dimension_semantics = [#tpu.dimension_semantics<parallel>], iteration_bounds = array<i64: 1>, scalar_prefetch = 0 : i64, scratch_operands = 0 : i64, tpu.core_type = #tpu.core_type<tc>, window_params = [{transform_indices = @transform_0, window_bounds = array<i64: 32, 32>}, {pipeline_mode = #tpu.pipeline_mode<synchronous>, transform_indices = @transform_1, window_bounds = array<i64: 32, 32>}, {pipeline_mode = #tpu.pipeline_mode<synchronous>, transform_indices = @transform_2, window_bounds = array<i64: 1, 32>}, {pipeline_mode = #tpu.pipeline_mode<synchronous>, transform_indices = @transform_3, window_bounds = array<i64: 4, 32, 128>}, {pipeline_mode = #tpu.pipeline_mode<synchronous>, transform_indices = @transform_4, window_bounds = array<i64: 1, 128>}, {transform_indices = @transform_5, window_bounds = array<i64: 8, 128>}]} {
    %c0 = arith.constant 0 : index
    %c0_0 = arith.constant 0 : index
    %0 = vector.load %arg1[%c0, %c0_0] : memref<32x32xbf16, #tpu.memory_space<vmem>>, vector<32x32xbf16>
    %c0_1 = arith.constant 0 : index
    %c0_2 = arith.constant 0 : index
    %1 = vector.load %arg2[%c0_1, %c0_2] : memref<32x32xbf16, #tpu.memory_space<vmem>>, vector<32x32xbf16>
    %cst = arith.constant dense<0.000000e+00> : vector<32x32xf32>
    %2 = tpu.matmul %0, %1, %cst {dimension_numbers = #tpu.dot_dimension_numbers<[1], [0], [0], [1], [0, 0, 1, 1], [], []>} : vector<32x32xbf16>, vector<32x32xbf16>, vector<32x32xf32> -> vector<32x32xf32>
    %c0_3 = arith.constant 0 : index
    %c0_4 = arith.constant 0 : index
    %3 = vector.load %arg3[%c0_3, %c0_4] : memref<1x32xf32, #tpu.memory_space<vmem>>, vector<1x32xf32>
    %4 = vector.broadcast %3 : vector<1x32xf32> to vector<32x32xf32>
    %5 = arith.addf %2, %4 : vector<32x32xf32>
    %cst_5 = arith.constant 0.000000e+00 : f32
    %6 = vector.broadcast %cst_5 : f32 to vector<32x32xf32>
    %7 = arith.cmpf oge, %5, %6 : vector<32x32xf32>
    %cst_6 = arith.constant 0.00999999977 : f32
    %8 = vector.broadcast %cst_6 : f32 to vector<32x32xf32>
    %9 = arith.mulf %8, %5 : vector<32x32xf32>
    %10 = arith.select %7, %5, %9 : vector<32x32xi1>, vector<32x32xf32>
    %11 = arith.truncf %10 : vector<32x32xf32> to vector<32x32xbf16>
    %c0_7 = arith.constant 0 : index
    %c0_8 = arith.constant 0 : index
    %12 = vector.load %arg5[%c0_7, %c0_8] : memref<1x128xf32, #tpu.memory_space<vmem>>, vector<1x128xf32>
    %13 = vector.shape_cast %12 : vector<1x128xf32> to vector<1x128xf32>
    %14 = vector.broadcast %13 : vector<1x128xf32> to vector<8x128xf32>
    %15 = vector.extract_strided_slice %11 {offsets = [0, 0], sizes = [8, 32], strides = [1, 1]} : vector<32x32xbf16> to vector<8x32xbf16>
    %c0_9 = arith.constant 0 : index
    %c0_10 = arith.constant 0 : index
    %c0_11 = arith.constant 0 : index
    %16 = vector.load %arg4[%c0_9, %c0_10, %c0_11] : memref<4x32x128xbf16, #tpu.memory_space<vmem>>, vector<1x32x128xbf16>
    %17 = vector.shape_cast %16 : vector<1x32x128xbf16> to vector<32x128xbf16>
    %cst_12 = arith.constant dense<0.000000e+00> : vector<8x128xf32>
    %18 = tpu.matmul %15, %17, %cst_12 {dimension_numbers = #tpu.dot_dimension_numbers<[1], [0], [0], [1], [0, 0, 1, 1], [], []>} : vector<8x32xbf16>, vector<32x128xbf16>, vector<8x128xf32> -> vector<8x128xf32>
    %19 = arith.addf %14, %18 : vector<8x128xf32>
    %20 = vector.extract_strided_slice %11 {offsets = [8, 0], sizes = [8, 32], strides = [1, 1]} : vector<32x32xbf16> to vector<8x32xbf16>
    %c1 = arith.constant 1 : index
    %c0_13 = arith.constant 0 : index
    %c0_14 = arith.constant 0 : index
    %21 = vector.load %arg4[%c1, %c0_13, %c0_14] : memref<4x32x128xbf16, #tpu.memory_space<vmem>>, vector<1x32x128xbf16>
    %22 = vector.shape_cast %21 : vector<1x32x128xbf16> to vector<32x128xbf16>
    %cst_15 = arith.constant dense<0.000000e+00> : vector<8x128xf32>
    %23 = tpu.matmul %20, %22, %cst_15 {dimension_numbers = #tpu.dot_dimension_numbers<[1], [0], [0], [1], [0, 0, 1, 1], [], []>} : vector<8x32xbf16>, vector<32x128xbf16>, vector<8x128xf32> -> vector<8x128xf32>
    %24 = arith.addf %19, %23 : vector<8x128xf32>
    %25 = vector.extract_strided_slice %11 {offsets = [16, 0], sizes = [8, 32], strides = [1, 1]} : vector<32x32xbf16> to vector<8x32xbf16>
    %c2 = arith.constant 2 : index
    %c0_16 = arith.constant 0 : index
    %c0_17 = arith.constant 0 : index
    %26 = vector.load %arg4[%c2, %c0_16, %c0_17] : memref<4x32x128xbf16, #tpu.memory_space<vmem>>, vector<1x32x128xbf16>
    %27 = vector.shape_cast %26 : vector<1x32x128xbf16> to vector<32x128xbf16>
    %cst_18 = arith.constant dense<0.000000e+00> : vector<8x128xf32>
    %28 = tpu.matmul %25, %27, %cst_18 {dimension_numbers = #tpu.dot_dimension_numbers<[1], [0], [0], [1], [0, 0, 1, 1], [], []>} : vector<8x32xbf16>, vector<32x128xbf16>, vector<8x128xf32> -> vector<8x128xf32>
    %29 = arith.addf %24, %28 : vector<8x128xf32>
    %30 = vector.extract_strided_slice %11 {offsets = [24, 0], sizes = [8, 32], strides = [1, 1]} : vector<32x32xbf16> to vector<8x32xbf16>
    %c3 = arith.constant 3 : index
    %c0_19 = arith.constant 0 : index
    %c0_20 = arith.constant 0 : index
    %31 = vector.load %arg4[%c3, %c0_19, %c0_20] : memref<4x32x128xbf16, #tpu.memory_space<vmem>>, vector<1x32x128xbf16>
    %32 = vector.shape_cast %31 : vector<1x32x128xbf16> to vector<32x128xbf16>
    %cst_21 = arith.constant dense<0.000000e+00> : vector<8x128xf32>
    %33 = tpu.matmul %30, %32, %cst_21 {dimension_numbers = #tpu.dot_dimension_numbers<[1], [0], [0], [1], [0, 0, 1, 1], [], []>} : vector<8x32xbf16>, vector<32x128xbf16>, vector<8x128xf32> -> vector<8x128xf32>
    %34 = arith.addf %29, %33 : vector<8x128xf32>
    %c0_22 = arith.constant 0 : index
    %c0_23 = arith.constant 0 : index
    %35 = vector.load %arg6[%c0_22, %c0_23] : memref<8x128xf32, #tpu.memory_space<vmem>>, vector<8x128xf32>
    tpu.vector_store %arg6[%c0_22, %c0_23], %34 {strides = array<i32>} : memref<8x128xf32, #tpu.memory_space<vmem>>, vector<8x128xf32>,
    return
  }
  func.func @transform_0(%arg0: i32) -> (i32, i32) {
    %c0_i32 = arith.constant 0 : i32
    %c0_i32_0 = arith.constant 0 : i32
    return %arg0, %c0_i32 : i32, i32
  }
  func.func @transform_1(%arg0: i32) -> (i32, i32) {
    %c0_i32 = arith.constant 0 : i32
    %c0_i32_0 = arith.constant 0 : i32
    %c0_i32_1 = arith.constant 0 : i32
    return %c0_i32, %c0_i32_0 : i32, i32
  }
  func.func @transform_2(%arg0: i32) -> (i32, i32) {
    %c0_i32 = arith.constant 0 : i32
    %c0_i32_0 = arith.constant 0 : i32
    %c0_i32_1 = arith.constant 0 : i32
    return %c0_i32, %c0_i32_0 : i32, i32
  }
  func.func @transform_3(%arg0: i32) -> (i32, i32, i32) {
    %c0_i32 = arith.constant 0 : i32
    %c0_i32_0 = arith.constant 0 : i32
    %c0_i32_1 = arith.constant 0 : i32
    %c0_i32_2 = arith.constant 0 : i32
    return %c0_i32, %c0_i32_0, %c0_i32_1 : i32, i32, i32
  }
  func.func @transform_4(%arg0: i32) -> (i32, i32) {
    %c0_i32 = arith.constant 0 : i32
    %c0_i32_0 = arith.constant 0 : i32
    %c0_i32_1 = arith.constant 0 : i32
    return %c0_i32, %c0_i32_0 : i32, i32
  }
  func.func @transform_5(%arg0: i32) -> (i32, i32) {
    %c0_i32 = arith.constant 0 : i32
    %c0_i32_0 = arith.constant 0 : i32
    return %arg0, %c0_i32 : i32, i32
  }
}

</mosaic_0001>

<llo_original>
// kernel: tpu_custom_call.1
$region0: #{tpu_custom_call.1}
  #allocation0 [shape = 'u32[]', space=smem, size = 0x4, offset = 0x4, fixed_abs, tag = 'smem constant byte address 0x4 - core index']
  #allocation1 [shape = 'u32[72,128]{1,0:T(1,128)}', space=vmem, size = 0x9000, scoped, tag = 'internal scratch']
  %s0 = inlined_call_operand.hbm [shape: bf16[32,32], index: 0, kind: input, shape index: {}]
  %s1 = inlined_call_operand.hbm [shape: bf16[32,32], index: 1, kind: input, shape index: {}]
  %s2 = inlined_call_operand.vmem [shape: f32[1,32], index: 2, kind: input, shape index: {}]
  %s3 = inlined_call_operand.hbm [shape: bf16[4,32,128], index: 3, kind: input, shape index: {}]
  %s4 = inlined_call_operand.vmem [shape: f32[1,128], index: 4, kind: input, shape index: {}]
  %s5 = inlined_call_operand.hbm [shape: f32[8,128], index: 5, kind: output, shape index: {}]
  %s6 = sld [smem:[#allocation0]]
  $region42: #{tpu_custom_call.1} parent=0
    _
  %s8 = ssub.s32 1, %s6
  %s9 = scalar_select 0, %s8, %s6
  $region1: #{tpu_custom_call.1} parent=0
    #allocation2 [shape = 'u8[8192]{0}', space=vmem, size = 0x2000, scoped, tag = 'input window, operand 0, single buffered']
    #allocation3 [shape = 's32[1]{0}', space=sflag, size = 0x4, scoped, tag = 'scoped memory for tpu_custom_call.1']
    #allocation4 [shape = 's32[1]{0}', space=sflag, size = 0x4, scoped, tag = 'scoped memory for tpu_custom_call.1']
    #allocation5 [shape = 'u8[8192]{0}', space=vmem, size = 0x2000, scoped, tag = 'input window, operand 1, single buffered']
    #allocation6 [shape = 's32[1]{0}', space=sflag, size = 0x4, scoped, tag = 'scoped memory for tpu_custom_call.1']
    #allocation7 [shape = 'u8[32768]{0}', space=vmem, size = 0x8000, scoped, tag = 'input window, operand 3, single buffered']
    #allocation8 [shape = 'u8[4096]{0}', space=vmem, size = 0x1000, scoped, tag = 'output window, operand 0, single buffered']
    %10 = vsyncpa [#allocation3], 0
    %11 = vsyncpa [#allocation6], 0
    %12 = vsyncpa [#allocation4], 0
    // Predicated region
    $region2: #{tpu_custom_call.1} parent=1 // pred_check
      _
    $region3: #{tpu_custom_call.1} parent=1 // pred_check_branch
      %14 = sbr.rel (0) target = $region5
    $region4: #{tpu_custom_call.1} parent=1 // pred_region
      %16 = vsyncadd [#allocation3], 0
      %s17 = sshll.u32 %s0, 4
      %s18 = int_to_ptr.hbm [resolvable:$true] %s17
      %s19 = sshll.u32 [#allocation2], 4
      %s20 = int_to_ptr.vmem [resolvable:$true] %s19
      %25 = dma.hbm_to_vmem [thread:$0]  %s18, 256, %s20, [#allocation3], 64, 64, 4
    $region5: #{tpu_custom_call.1} parent=1 // pred_fallthru
      _
    // Predicated region
    $region6: #{tpu_custom_call.1} parent=1 // pred_check
      _
    $region7: #{tpu_custom_call.1} parent=1 // pred_check_branch
      %27 = sbr.rel (0) target = $region9
    $region8: #{tpu_custom_call.1} parent=1 // pred_region
      %29 = vsyncadd [#allocation6], 0
      %s30 = sshll.u32 %s1, 4
      %s31 = int_to_ptr.hbm [resolvable:$true] %s30
      %s32 = sshll.u32 [#allocation5], 4
      %s33 = int_to_ptr.vmem [resolvable:$true] %s32
      %38 = dma.hbm_to_vmem [thread:$0]  %s31, 256, %s33, [#allocation6], 64, 64, 4
    $region9: #{tpu_custom_call.1} parent=1 // pred_fallthru
      _
    // Predicated region
    $region10: #{tpu_custom_call.1} parent=1 // pred_check
      _
    $region11: #{tpu_custom_call.1} parent=1 // pred_check_branch
      %40 = sbr.rel (0) target = $region13
    $region12: #{tpu_custom_call.1} parent=1 // pred_region
      _
    $region13: #{tpu_custom_call.1} parent=1 // pred_fallthru
      _
    // Predicated region
    $region14: #{tpu_custom_call.1} parent=1 // pred_check
      _
    $region15: #{tpu_custom_call.1} parent=1 // pred_check_branch
      %42 = sbr.rel (0) target = $region17
    $region16: #{tpu_custom_call.1} parent=1 // pred_region
      %44 = vsyncadd [#allocation6], 0
      %s45 = sshll.u32 %s3, 4
      %s46 = int_to_ptr.hbm [resolvable:$true] %s45
      %s47 = sshll.u32 [#allocation7], 4
      %s48 = int_to_ptr.vmem [resolvable:$true] %s47
      %53 = dma.hbm_to_vmem [thread:$0]  %s46, 1024, %s48, [#allocation6], 64, 64, 4
    $region17: #{tpu_custom_call.1} parent=1 // pred_fallthru
      _
    // Predicated region
    $region18: #{tpu_custom_call.1} parent=1 // pred_check
      _
    $region19: #{tpu_custom_call.1} parent=1 // pred_check_branch
      %55 = sbr.rel (0) target = $region21
    $region20: #{tpu_custom_call.1} parent=1 // pred_region
      _
    $region21: #{tpu_custom_call.1} parent=1 // pred_fallthru
      _
    // Predicated region
    $region22: #{tpu_custom_call.1} parent=1 // pred_check
      _
    $region23: #{tpu_custom_call.1} parent=1 // pred_check_branch
      %57 = sbr.rel (0) target = $region25
    $region24: #{tpu_custom_call.1} parent=1 // pred_region
      %59 = dma.done [#allocation3], 256
    $region25: #{tpu_custom_call.1} parent=1 // pred_fallthru
      _
    // Predicated region
    $region26: #{tpu_custom_call.1} parent=1 // pred_check
      _
    $region27: #{tpu_custom_call.1} parent=1 // pred_check_branch
      %61 = sbr.rel (0) target = $region29
    $region28: #{tpu_custom_call.1} parent=1 // pred_region
      %63 = dma.done [#allocation6], 256
    $region29: #{tpu_custom_call.1} parent=1 // pred_fallthru
      _
    // Predicated region
    $region30: #{tpu_custom_call.1} parent=1 // pred_check
      _
    $region31: #{tpu_custom_call.1} parent=1 // pred_check_branch
      %65 = sbr.rel (0) target = $region33
    $region32: #{tpu_custom_call.1} parent=1 // pred_region
      %67 = dma.done [#allocation6], 1024
    $region33: #{tpu_custom_call.1} parent=1 // pred_fallthru
      _
    %v69 = vld [vmem:[#allocation2] sm:$0xf]
    %v70 = vld [vmem:[#allocation2 + $0x4] sm:$0xf]
    %v71 = vld [vmem:[#allocation2 + $0x8] sm:$0xf]
    %v72 = vld [vmem:[#allocation2 + $0xc] sm:$0xf]
    %v73 = vld [vmem:[#allocation5] sm:$0xf]
    %v74 = vld [vmem:[#allocation5 + $0x4] sm:$0xf]
    %v75 = vld [vmem:[#allocation5 + $0x8] sm:$0xf]
    %v76 = vld [vmem:[#allocation5 + $0xc] sm:$0xf]
    %v77 = vld [vmem:[%s2] sm:$0x1]
    %v79 = vperm.slane %v77, 0
    %v85 = vunpack.c.l.b16 %v69
    %v86 = vunpack.c.l.b16 %v70
    %v87 = vunpack.c.l.b16 %v71
    %v88 = vunpack.c.l.b16 %v72
    %v89 = vpack.c.b16 %v86, %v85
    %v90 = vpack.c.b16 %v88, %v87
    %v95 = vunpack.c.l.b16 %v73
    %v96 = vunpack.c.l.b16 %v74
    %v97 = vunpack.c.l.b16 %v75
    %v98 = vunpack.c.l.b16 %v76
    %v99 = vpack.c.b16 %v96, %v95
    %v100 = vpack.c.b16 %v98, %v97
    %vm103 = vcmask 261120
    %v105 = vsel %vm103, %v89, 0
    %v108 = vsel %vm103, %v90, 0
    %110 = vmatpush.bf16.msra.mxu0 0
    %111 = vmatpush.bf16.msra.mxu0 0
    %112 = vmatpush.bf16.msra.mxu0 0
    %113 = vmatpush.bf16.msra.mxu0 0
    %114 = vmatpush.bf16.msra.mxu0 0
    %115 = vmatpush.bf16.msra.mxu0 0
    %116 = vmatpush.bf16.msra.mxu0 %v100
    %117 = vmatpush.bf16.msra.mxu0 %v99
    %118 = vmatmul.bf16.gmra.mxu0 %v105
    %v119 = vpop.f32.mrf.mxu0
    %v120 = vadd.f32 %v79, %v119
    %v121 = vpop.f32.mrf.mxu0
    %v122 = vadd.f32 %v79, %v121
    %123 = vmatmul.bf16.gmra.mxu0 %v108
    %v124 = vpop.f32.mrf.mxu0
    %v125 = vadd.f32 %v79, %v124
    %v126 = vpop.f32.mrf.mxu0
    %v127 = vadd.f32 %v79, %v126
    %128 = vdwg.mxu0
    %vm129 = vcmp.ge.f32.partialorder %v120, 0.0
    %vm130 = vcmp.ge.f32.partialorder %v122, 0.0
    %vm131 = vcmp.ge.f32.partialorder %v125, 0.0
    %vm132 = vcmp.ge.f32.partialorder %v127, 0.0
    %v133 = vmul.f32 %v120, 0.01
    %v134 = vmul.f32 %v122, 0.01
    %v135 = vmul.f32 %v125, 0.01
    %v136 = vmul.f32 %v127, 0.01
    %v137 = vsel %vm129, %v120, %v133
    %v138 = vsel %vm130, %v122, %v134
    %v139 = vsel %vm131, %v125, %v135
    %v140 = vsel %vm132, %v127, %v136
    %v141 = vpack.c.bf16 %v137, %v137
    %v142 = vpack.c.bf16 %v138, %v138
    %v143 = vpack.c.bf16 %v139, %v139
    %v144 = vpack.c.bf16 %v140, %v140
    %v145 = vld [vmem:[%s4] sm:$0x1]
    %v147 = vperm.slane %v145, 0
    %v149 = vld [vmem:[#allocation7] sm:$0xf]
    %v150 = vld [vmem:[#allocation7 + $0x4] sm:$0xf]
    %v151 = vld [vmem:[#allocation7 + $0x8] sm:$0xf]
    %v152 = vld [vmem:[#allocation7 + $0xc] sm:$0xf]
    %v157 = vunpack.c.l.b16 %v149
    %v158 = vunpack.c.l.b16 %v150
    %v159 = vunpack.c.l.b16 %v151
    %v160 = vunpack.c.l.b16 %v152
    %v161 = vpack.c.b16 %v158, %v157
    %v162 = vpack.c.b16 %v160, %v159
    %v166 = vsel %vm103, %v141, 0
    %168 = vmatpush.bf16.msra.mxu0 0
    %169 = vmatpush.bf16.msra.mxu0 0
    %170 = vmatpush.bf16.msra.mxu0 0
    %171 = vmatpush.bf16.msra.mxu0 0
    %172 = vmatpush.bf16.msra.mxu0 0
    %173 = vmatpush.bf16.msra.mxu0 0
    %174 = vmatpush.bf16.msra.mxu0 %v162
    %175 = vmatpush.bf16.msra.mxu0 %v161
    %176 = vmatmul.bf16.gmra.mxu0 %v166
    %v177 = vpop.f32.mrf.mxu0
    %v178 = vadd.f32 0.0, %v177
    %v179 = vpop.f32.mrf.mxu0
    %180 = vdwg.mxu0
    %v181 = vadd.f32 %v147, %v178
    %s182 = scalar_lea.vmem [#allocation7], 16
    %v183 = vld [vmem:[%s182] sm:$0xf]
    %v184 = vld [vmem:[%s182 + $0x4] sm:$0xf]
    %v185 = vld [vmem:[%s182 + $0x8] sm:$0xf]
    %v186 = vld [vmem:[%s182 + $0xc] sm:$0xf]
    %v191 = vunpack.c.l.b16 %v183
    %v192 = vunpack.c.l.b16 %v184
    %v193 = vunpack.c.l.b16 %v185
    %v194 = vunpack.c.l.b16 %v186
    %v195 = vpack.c.b16 %v192, %v191
    %v196 = vpack.c.b16 %v194, %v193
    %v200 = vsel %vm103, %v142, 0
    %202 = vmatpush.bf16.msra.mxu0 0
    %203 = vmatpush.bf16.msra.mxu0 0
    %204 = vmatpush.bf16.msra.mxu0 0
    %205 = vmatpush.bf16.msra.mxu0 0
    %206 = vmatpush.bf16.msra.mxu0 0
    %207 = vmatpush.bf16.msra.mxu0 0
    %208 = vmatpush.bf16.msra.mxu0 %v196
    %209 = vmatpush.bf16.msra.mxu0 %v195
    %210 = vmatmul.bf16.gmra.mxu0 %v200
    %v211 = vpop.f32.mrf.mxu0
    %v212 = vadd.f32 0.0, %v211
    %v213 = vpop.f32.mrf.mxu0
    %214 = vdwg.mxu0
    %v215 = vadd.f32 %v181, %v212
    %s216 = scalar_lea.vmem [#allocation7], 32
    %v217 = vld [vmem:[%s216] sm:$0xf]
    %v218 = vld [vmem:[%s216 + $0x4] sm:$0xf]
    %v219 = vld [vmem:[%s216 + $0x8] sm:$0xf]
    %v220 = vld [vmem:[%s216 + $0xc] sm:$0xf]
    %v225 = vunpack.c.l.b16 %v217
    %v226 = vunpack.c.l.b16 %v218
    %v227 = vunpack.c.l.b16 %v219
    %v228 = vunpack.c.l.b16 %v220
    %v229 = vpack.c.b16 %v226, %v225
    %v230 = vpack.c.b16 %v228, %v227
    %v234 = vsel %vm103, %v143, 0
    %236 = vmatpush.bf16.msra.mxu0 0
    %237 = vmatpush.bf16.msra.mxu0 0
    %238 = vmatpush.bf16.msra.mxu0 0
    %239 = vmatpush.bf16.msra.mxu0 0
    %240 = vmatpush.bf16.msra.mxu0 0
    %241 = vmatpush.bf16.msra.mxu0 0
    %242 = vmatpush.bf16.msra.mxu0 %v230
    %243 = vmatpush.bf16.msra.mxu0 %v229
    %244 = vmatmul.bf16.gmra.mxu0 %v234
    %v245 = vpop.f32.mrf.mxu0
    %v246 = vadd.f32 0.0, %v245
    %v247 = vpop.f32.mrf.mxu0
    %248 = vdwg.mxu0
    %v249 = vadd.f32 %v215, %v246
    %s250 = scalar_lea.vmem [#allocation7], 48
    %v251 = vld [vmem:[%s250] sm:$0xf]
    %v252 = vld [vmem:[%s250 + $0x4] sm:$0xf]
    %v253 = vld [vmem:[%s250 + $0x8] sm:$0xf]
    %v254 = vld [vmem:[%s250 + $0xc] sm:$0xf]
    %v259 = vunpack.c.l.b16 %v251
    %v260 = vunpack.c.l.b16 %v252
    %v261 = vunpack.c.l.b16 %v253
    %v262 = vunpack.c.l.b16 %v254
    %v263 = vpack.c.b16 %v260, %v259
    %v264 = vpack.c.b16 %v262, %v261
    %v268 = vsel %vm103, %v144, 0
    %270 = vmatpush.bf16.msra.mxu0 0
    %271 = vmatpush.bf16.msra.mxu0 0
    %272 = vmatpush.bf16.msra.mxu0 0
    %273 = vmatpush.bf16.msra.mxu0 0
    %274 = vmatpush.bf16.msra.mxu0 0
    %275 = vmatpush.bf16.msra.mxu0 0
    %276 = vmatpush.bf16.msra.mxu0 %v264
    %277 = vmatpush.bf16.msra.mxu0 %v263
    %278 = vmatmul.bf16.gmra.mxu0 %v268
    %v279 = vpop.f32.mrf.mxu0
    %v280 = vadd.f32 0.0, %v279
    %v281 = vpop.f32.mrf.mxu0
    %282 = vdwg.mxu0
    %v283 = vadd.f32 %v249, %v280
    %284 = vst [vmem:[#allocation8] sm:$0xff] %v283
    // Predicated region
    $region34: #{tpu_custom_call.1} parent=1 // pred_check
      _
    $region35: #{tpu_custom_call.1} parent=1 // pred_check_branch
      %286 = sbr.rel (0) target = $region37
    $region36: #{tpu_custom_call.1} parent=1 // pred_region
      %288 = vsyncadd [#allocation4], 0
      %s290 = sshll.u32 [#allocation8], 4
      %s291 = int_to_ptr.vmem [resolvable:$true] %s290
      %s292 = sshll.u32 %s5, 4
      %s293 = int_to_ptr.hbm [resolvable:$true] %s292
      %295 = dma.vmem_to_hbm [thread:$0]  %s291, 128, %s293, [#allocation4]
    $region37: #{tpu_custom_call.1} parent=1 // pred_fallthru
      _
    // Predicated region
    $region38: #{tpu_custom_call.1} parent=1 // pred_check
      _
    $region39: #{tpu_custom_call.1} parent=1 // pred_check_branch
      %297 = sbr.rel (0) target = $region41
    $region40: #{tpu_custom_call.1} parent=1 // pred_region
      %299 = dma.done [#allocation4], 128
    $region41: #{tpu_custom_call.1} parent=1 // pred_fallthru
      _
    %300 = vsyncpa [#allocation3], 1
    %301 = vsyncpa [#allocation6], 1
    %302 = vsyncpa [#allocation4], 1

</llo_original>
